<compile_context>
chip_gen: v7x
topology: tpu7x:2x2x1
jax: 0.10.0
libtpu: 0.0.40
codegen_flags: <defaults>
</compile_context>

<pallas_src>
import functools

import jax
import jax.numpy as jnp
from jax import lax
from jax.experimental import pallas as pl
from jax.experimental.pallas import tpu as pltpu


_MAX_CHUNK = 512                      # vocab slab width (lanes); <=1024 for v5e
_INTERMEDIATE_BUDGET = 4 * 1024 * 1024  # budget for (tile_r, chunk) temporaries


def _lm_criterion_kernel(iota_ref, logits_ref, target_ref, mask_ref, out_ref,
                         *, num_rows, chunk):
    # iota_ref:   (1, V) int32 absolute vocab ids, resident across grid steps
    # logits_ref: (TILE_R, V) native dtype (f32/bf16) log-probs
    # target_ref: (TILE_R, 1) int32
    # mask_ref:   (TILE_R, 1) float32
    # out_ref:    (8, 128) float32   per-tile partial sum, broadcast to the block
    i = pl.program_id(0)
    tile_r = logits_ref.shape[0]
    vocab = logits_ref.shape[1]

    tgt = target_ref[...]                      # (TILE_R, 1) int32
    msk = mask_ref[...]                        # (TILE_R, 1) f32

    def picked_slab(ids, slab):
        # ids: (1, w) absolute vocab ids; slab: (TILE_R, w) logits, native dtype.
        # Exactly one hit per row -> the reduce is exact in any dtype.
        hit = ids == tgt                                              # (TILE_R, w)
        return jnp.sum(jnp.where(hit, slab, 0), axis=-1,
                       keepdims=True).astype(jnp.float32)             # (TILE_R, 1)

    if vocab <= chunk:
        # Small vocab: one pass over the full block, no loop.
        picked = picked_slab(iota_ref[...], logits_ref[...])
    else:
        # Large vocab: chunk the lane axis so intermediates stay (TILE_R, chunk).
        num_full = vocab // chunk

        def body(c, acc):
            lo = pl.multiple_of(c * chunk, chunk)                     # 128-aligned
            return acc + picked_slab(iota_ref[:, pl.ds(lo, chunk)],
                                     logits_ref[:, pl.ds(lo, chunk)])

        picked = lax.fori_loop(0, num_full, body,
                               jnp.zeros((tile_r, 1), jnp.float32))
        rem = vocab - num_full * chunk
        if rem:
            lo = num_full * chunk                                     # static tail
            picked = picked + picked_slab(iota_ref[:, lo:vocab],
                                          logits_ref[:, lo:vocab])

    # The last row-block may overrun the true row count (logits is NOT padded
    # in HBM); those rows hold unspecified data, so SELECT them to zero rather
    # than relying on a 0-mask multiply (which would propagate NaNs).
    row = lax.broadcasted_iota(jnp.int32, (tile_r, 1), 0) + i * tile_r
    contrib = jnp.where(row < num_rows, picked * msk, 0.0)            # (TILE_R, 1)

    # One lane-dense (8, 128) partial-sum block per grid step (unmasked stores).
    tile_sum = jnp.sum(contrib, axis=0, keepdims=True)                # (1, 1) f32
    out_ref[...] = jnp.broadcast_to(tile_sum, out_ref.shape)


def _round_up(x, m):
    return ((x + m - 1) // m) * m


def _vmem_budgets():
    """(per-buffer logits budget, vmem_limit_bytes) tuned per TPU generation."""
    try:
        cap = pltpu.get_tpu_info().vmem_capacity_bytes
    except Exception:
        cap = 64 * 1024 * 1024                       # assume the tightest (v7x)
    if cap <= 64 * 1024 * 1024:                      # v7x-class: 64 MiB / TC
        return 6 * 1024 * 1024, 40 * 1024 * 1024
    return 16 * 1024 * 1024, 64 * 1024 * 1024        # v5e / v6e: 128 MiB physical


def _pick_tile_r(num_rows, vocab, itemsize, per_buffer_budget):
    """Largest row tile whose double-buffered logits block AND chunked
    intermediates fit VMEM, while keeping >= 2 grid steps for megacore."""
    # sublane packing multiple: 8 for 4-byte, 16 for 2-byte, 32 for 1-byte dtypes
    mult = max(8, 8 * (4 // max(1, itemsize)))
    rows_by_dma = per_buffer_budget // max(1, vocab * itemsize)
    chunk = min(_round_up(vocab, 128), _MAX_CHUNK)
    rows_by_interm = _INTERMEDIATE_BUDGET // max(1, chunk * 12)   # ~3 f32 temps
    tile_r = min(rows_by_dma, rows_by_interm, 1024, _round_up(num_rows, mult))
    if num_rows > mult:
        # keep num_tiles >= 2 so the "parallel" axis can shard across 2 TCs (v7x)
        tile_r = min(tile_r, _round_up(pl.cdiv(num_rows, 2), mult))
    tile_r = max(mult, (tile_r // mult) * mult)
    return tile_r


def language_model_criterion(logits, target, mask, *, tile_r=None):
    """logits: (N, T, V) log-probs; target: (N, T) int; mask: (N, T) float."""
    N, T, V = logits.shape
    # Match PyTorch: truncate target/mask to logits' seq length.
    target = target[:, :T]
    mask = mask[:, :T]

    logits_flat = logits.reshape(-1, V)                        # (R, V) native dtype
    target_flat = target.reshape(-1, 1).astype(jnp.int32)      # (R, 1)
    mask_flat = mask.reshape(-1, 1).astype(jnp.float32)        # (R, 1)
    vocab_ids = jnp.arange(V, dtype=jnp.int32).reshape(1, V)   # (1, V) resident

    R = logits_flat.shape[0]
    itemsize = jnp.dtype(logits_flat.dtype).itemsize
    per_buffer_budget, vmem_limit = _vmem_budgets()
    if tile_r is None:
        tile_r = _pick_tile_r(R, V, itemsize, per_buffer_budget)

    num_tiles = pl.cdiv(R, tile_r)

    cost = pl.CostEstimate(
        flops=4 * R * V,
        transcendentals=0,
        bytes_accessed=R * V * itemsize + R * 8 + V * 4 + num_tiles * 8 * 128 * 4,
    )

    partials = pl.pallas_call(
        functools.partial(_lm_criterion_kernel, num_rows=R, chunk=_MAX_CHUNK),
        out_shape=jax.ShapeDtypeStruct((num_tiles * 8, 128), jnp.float32),
        grid_spec=pltpu.PrefetchScalarGridSpec(
            num_scalar_prefetch=0,
            grid=(num_tiles,),
            in_specs=[
                pl.BlockSpec((1, V), lambda i: (0, 0)),         # vocab ids, resident
                pl.BlockSpec((tile_r, V), lambda i: (i, 0)),    # logits, native dtype
                pl.BlockSpec((tile_r, 1), lambda i: (i, 0)),    # target
                pl.BlockSpec((tile_r, 1), lambda i: (i, 0)),    # mask
            ],
            out_specs=pl.BlockSpec((8, 128), lambda i: (i, 0)),
        ),
        compiler_params=pltpu.CompilerParams(
            dimension_semantics=("parallel",),       # no shared acc -> megacore OK
            vmem_limit_bytes=vmem_limit,
        ),
        cost_estimate=cost,
    )(vocab_ids, logits_flat, target_flat, mask_flat)

    per_tile = partials.reshape(num_tiles, 8, 128)[:, 0, 0]     # (num_tiles,)
    # Negate and normalize once, on the final scalar (matches PyTorch: / batch_size).
    return (-jnp.sum(per_tile) / jnp.float32(N)).astype(jnp.float32)


def _reference(logits, target, mask):
    N, T, V = logits.shape
    target = target[:, :T]
    mask = mask[:, :T]
    lf = logits.reshape(-1, V).astype(jnp.float32)
    tf = target.reshape(-1)
    mf = mask.reshape(-1).astype(jnp.float32)
    loss = -jnp.take_along_axis(lf, tf[:, None], axis=1)[:, 0]
    return jnp.sum(loss * mf) / N


if __name__ == "__main__":
    key = jax.random.PRNGKey(0)

    # Case 1: f32 logits, shapes matching the module spec (batch=2, seq=8, vocab=32).
    # Auto tile sizing gives tile_r=8 -> 2 grid steps (exercises multi-tile path).
    N, T, V = 2, 8, 32
    k1, k2, k3 = jax.random.split(key, 3)
    raw = jax.random.normal(k1, (N, T, V), dtype=jnp.float32)
    logits = jax.nn.log_softmax(raw, axis=-1)
    target = jax.random.randint(k2, (N, T), 0, V, dtype=jnp.int32)
    mask = (jax.random.uniform(k3, (N, T)) > 0.3).astype(jnp.float32)

    out = jax.block_until_ready(language_model_criterion(logits, target, mask))
    ref = _reference(logits, target, mask)
    assert jnp.allclose(out, ref, rtol=1e-5, atol=1e-5), (out, ref)

    # Case 2: bf16 logits, ragged row count (exercises native-dtype streaming and
    # in-kernel SELECT-masking of the partially out-of-bounds final row block).
    N2, T2, V2 = 3, 5, 32
    k4, k5, k6 = jax.random.split(jax.random.PRNGKey(1), 3)
    raw2 = jax.random.normal(k4, (N2, T2, V2), dtype=jnp.float32)
    logits2 = jax.nn.log_softmax(raw2, axis=-1).astype(jnp.bfloat16)
    target2 = jax.random.randint(k5, (N2, T2), 0, V2, dtype=jnp.int32)
    mask2 = (jax.random.uniform(k6, (N2, T2)) > 0.3).astype(jnp.float32)

    out2 = jax.block_until_ready(language_model_criterion(logits2, target2, mask2))
    ref2 = _reference(logits2.astype(jnp.float32), target2, mask2)
    assert jnp.allclose(out2, ref2, rtol=1e-2, atol=1e-2), (out2, ref2)

    # Case 3: vocab > chunk (V=1000) -> exercises the in-kernel fori_loop over
    # 512-lane vocab slabs plus the static ragged tail slice.
    N3, T3, V3 = 2, 8, 1000
    k7, k8, k9 = jax.random.split(jax.random.PRNGKey(2), 3)
    raw3 = jax.random.normal(k7, (N3, T3, V3), dtype=jnp.float32)
    logits3 = jax.nn.log_softmax(raw3, axis=-1)
    target3 = jax.random.randint(k8, (N3, T3), 0, V3, dtype=jnp.int32)
    mask3 = (jax.random.uniform(k9, (N3, T3)) > 0.3).astype(jnp.float32)

    out3 = jax.block_until_ready(language_model_criterion(logits3, target3, mask3))
    ref3 = _reference(logits3, target3, mask3)
    assert jnp.allclose(out3, ref3, rtol=1e-5, atol=1e-5), (out3, ref3)

    print("KERNEL_OK")
</pallas_src>

<mosaic_0001>
module attributes {stable_mosaic.version = 11 : i64} {
  func.func @_lm_criterion_kernel(%arg0: i32, %arg1: memref<1x32xi32, #tpu.memory_space<vmem>>, %arg2: memref<8x32xf32, #tpu.memory_space<vmem>>, %arg3: memref<8x1xi32, #tpu.memory_space<vmem>>, %arg4: memref<8x1xf32, #tpu.memory_space<vmem>>, %arg5: memref<8x128xf32, #tpu.memory_space<vmem>>) attributes {dimension_semantics = [#tpu.dimension_semantics<parallel>], iteration_bounds = array<i64: 2>, scalar_prefetch = 0 : i64, scratch_operands = 0 : i64, tpu.core_type = #tpu.core_type<tc>, window_params = [{pipeline_mode = #tpu.pipeline_mode<synchronous>, transform_indices = @transform_0, window_bounds = array<i64: 1, 32>}, {transform_indices = @transform_1, window_bounds = array<i64: 8, 32>}, {transform_indices = @transform_2, window_bounds = array<i64: 8, 1>}, {transform_indices = @transform_3, window_bounds = array<i64: 8, 1>}, {transform_indices = @transform_4, window_bounds = array<i64: 8, 128>}]} {
    %c0 = arith.constant 0 : index
    %c0_0 = arith.constant 0 : index
    %0 = vector.load %arg3[%c0, %c0_0] : memref<8x1xi32, #tpu.memory_space<vmem>>, vector<8x1xi32>
    %c0_1 = arith.constant 0 : index
    %c0_2 = arith.constant 0 : index
    %1 = vector.load %arg4[%c0_1, %c0_2] : memref<8x1xf32, #tpu.memory_space<vmem>>, vector<8x1xf32>
    %c0_3 = arith.constant 0 : index
    %c0_4 = arith.constant 0 : index
    %2 = vector.load %arg1[%c0_3, %c0_4] : memref<1x32xi32, #tpu.memory_space<vmem>>, vector<1x32xi32>
    %c0_5 = arith.constant 0 : index
    %c0_6 = arith.constant 0 : index
    %3 = vector.load %arg2[%c0_5, %c0_6] : memref<8x32xf32, #tpu.memory_space<vmem>>, vector<8x32xf32>
    %4 = vector.broadcast %2 : vector<1x32xi32> to vector<8x32xi32>
    %5 = vector.broadcast %0 : vector<8x1xi32> to vector<8x32xi32>
    %6 = arith.cmpi eq, %4, %5 : vector<8x32xi32>
    %c0_i32 = arith.constant 0 : i32
    %7 = arith.sitofp %c0_i32 : i32 to f32
    %8 = vector.broadcast %7 : f32 to vector<8x32xf32>
    %9 = arith.select %6, %3, %8 : vector<8x32xi1>, vector<8x32xf32>
    %cst = arith.constant dense<0.000000e+00> : vector<8xf32>
    %10 = vector.multi_reduction <add>, %9, %cst [1] : vector<8x32xf32> to vector<8xf32>
    %11 = vector.shape_cast %10 : vector<8xf32> to vector<8x1xf32>
    %12 = tpu.iota {dimensions = array<i32: 0>} : vector<8x1xi32>
    %c8_i32 = arith.constant 8 : i32
    %13 = arith.muli %arg0, %c8_i32 : i32
    %14 = vector.broadcast %13 : i32 to vector<8x1xi32>
    %15 = arith.addi %12, %14 : vector<8x1xi32>
    %c16_i32 = arith.constant 16 : i32
    %16 = vector.broadcast %c16_i32 : i32 to vector<8x1xi32>
    %17 = arith.cmpi slt, %15, %16 : vector<8x1xi32>
    %18 = arith.mulf %11, %1 : vector<8x1xf32>
    %cst_7 = arith.constant 0.000000e+00 : f32
    %19 = vector.broadcast %cst_7 : f32 to vector<8x1xf32>
    %20 = arith.select %17, %18, %19 : vector<8x1xi1>, vector<8x1xf32>
    %cst_8 = arith.constant dense<0.000000e+00> : vector<1xf32>
    %21 = vector.multi_reduction <add>, %20, %cst_8 [0] : vector<8x1xf32> to vector<1xf32>
    %22 = vector.shape_cast %21 : vector<1xf32> to vector<1x1xf32>
    %23 = vector.shape_cast %22 : vector<1x1xf32> to vector<1x1xf32>
    %24 = vector.broadcast %23 : vector<1x1xf32> to vector<8x128xf32>
    %c0_9 = arith.constant 0 : index
    %c0_10 = arith.constant 0 : index
    %25 = vector.load %arg5[%c0_9, %c0_10] : memref<8x128xf32, #tpu.memory_space<vmem>>, vector<8x128xf32>
    tpu.vector_store %arg5[%c0_9, %c0_10], %24 {strides = array<i32>} : memref<8x128xf32, #tpu.memory_space<vmem>>, vector<8x128xf32>,
    return
  }
  func.func @transform_0(%arg0: i32) -> (i32, i32) {
    %c0_i32 = arith.constant 0 : i32
    %c0_i32_0 = arith.constant 0 : i32
    %c0_i32_1 = arith.constant 0 : i32
    return %c0_i32, %c0_i32_0 : i32, i32
  }
  func.func @transform_1(%arg0: i32) -> (i32, i32) {
    %c0_i32 = arith.constant 0 : i32
    %c0_i32_0 = arith.constant 0 : i32
    return %arg0, %c0_i32 : i32, i32
  }
  func.func @transform_2(%arg0: i32) -> (i32, i32) {
    %c0_i32 = arith.constant 0 : i32
    %c0_i32_0 = arith.constant 0 : i32
    return %arg0, %c0_i32 : i32, i32
  }
  func.func @transform_3(%arg0: i32) -> (i32, i32) {
    %c0_i32 = arith.constant 0 : i32
    %c0_i32_0 = arith.constant 0 : i32
    return %arg0, %c0_i32 : i32, i32
  }
  func.func @transform_4(%arg0: i32) -> (i32, i32) {
    %c0_i32 = arith.constant 0 : i32
    %c0_i32_0 = arith.constant 0 : i32
    return %arg0, %c0_i32 : i32, i32
  }
}

</mosaic_0001>

<llo_original>
// kernel: tpu_custom_call.1
$region0: #{tpu_custom_call.1}
  #allocation0 [shape = 'u32[]', space=smem, size = 0x4, offset = 0x4, fixed_abs, tag = 'smem constant byte address 0x4 - core index']
  #allocation1 [shape = 'u32[144,128]{1,0:T(1,128)}', space=vmem, size = 0x12000, scoped, tag = 'internal scratch']
  %s0 = inlined_call_operand.vmem [shape: s32[1,32], index: 0, kind: input, shape index: {}]
  %s1 = inlined_call_operand.vmem [shape: f32[16,32], index: 1, kind: input, shape index: {}]
  %s2 = inlined_call_operand.vmem [shape: s32[16,1], index: 2, kind: input, shape index: {}]
  %s3 = inlined_call_operand.vmem [shape: f32[16,1], index: 3, kind: input, shape index: {}]
  %s4 = inlined_call_operand.hbm [shape: f32[16,128], index: 4, kind: output, shape index: {}]
  %s5 = sld [smem:[#allocation0]]
  $region49: #{tpu_custom_call.1} parent=0
    _
  %s7 = ssub.s32 1, %s5
  %s8 = scalar_select 0, %s7, %s5
  $region1: #{tpu_custom_call.1} parent=0
    #allocation2 [shape = 'u8[8192]{0}', space=vmem, size = 0x2000, scoped, tag = 'output window, operand 0']
    #allocation3 [shape = 's32[2]{0}', space=sflag, size = 0x8, scoped, tag = 'scoped memory for tpu_custom_call.1']
    %9 = vsyncpa [#allocation3], 0
    %s10 = scalar_lea.sflag [#allocation3], 1
    %11 = vsyncpa %s10, 0
    loop: start=0, step=1, limit=4
    $region2: #{tpu_custom_call.1} parent=1 // loop_pre_header
      _
    $region3: #{tpu_custom_call.1} parent=1 // loop_header
      %s13 = sphi 0, %s17
      %p14 = scmp.ge.s32.totalorder %s13, 4
      %s21 = sphi 0, %s21
      %s23 = sphi 0, %s21
      %s24 = sphi 0, %s23
      %s38 = sphi 0, %s24
      %s44 = sphi 0, %s46
      %s47 = sphi 0, %s44
      %s48 = sphi 0, %s47
      %s64 = sphi 0, %s48
      %s70 = sphi 0, %s72
      %s73 = sphi 0, %s70
      %s74 = sphi 0, %s73
      %s90 = sphi 0, %s74
      %s96 = sphi 0, %s98
      %s99 = sphi 0, %s96
      %s100 = sphi 0, %s99
      %s116 = sphi 0, %s100
      %s122 = sphi 0, %s124
      %s125 = sphi 0, %s122
      %s126 = sphi 0, %s125
      %s142 = sphi 0, %s126
    $region4: #{tpu_custom_call.1} parent=1 // loop_header_branch
      %16 = sbr.rel (%p14) target = $region8
    $region5: #{tpu_custom_call.1} parent=1 // loop_body
      %s18 = ssub.s32 %s13, 1
      %s19 = ssub.s32 %s13, 2
      %s20 = sadd.s32 %s13, 1
      %s22 = sadd.s32 %s21, 1
      %p25 = scmp.eq.s32.totalorder %s13, 1
      %p26 = scmp.ne.s32.totalorder %s21, %s23
      %p27 = scmp.eq.s32.totalorder %s13, 0
      %p28 = por %p26, %p27
      %p29 = scmp.ne.s32.totalorder %s21, %s23
      %p30 = scmp.eq.s32.totalorder %s18, 1
      %p31 = por %p29, %p30
      %p32 = scmp.ne.s32.totalorder %s23, %s24
      %p33 = scmp.eq.s32.totalorder %s18, 0
      %p34 = por %p32, %p33
      %p35 = scmp.ne.s32.totalorder %s23, %s24
      %p36 = scmp.eq.s32.totalorder %s19, 1
      %p37 = por %p35, %p36
      %p39 = scmp.ne.s32.totalorder %s24, %s38
      %p40 = scmp.eq.s32.totalorder %s19, 0
      %p41 = por %p39, %p40
      %s42 = ssub.s32 %s13, %s20
      %p43 = scmp.eq.s32.totalorder %s42, 0
      %s45 = sadd.s32 %s44, 1
      %s46 = scalar_select %p43, %s44, %s45
      %p49 = pneg %p43
      %p50 = scmp.eq.s32.totalorder %s13, 1
      %p51 = por %p49, %p50
      %p52 = scmp.ne.s32.totalorder %s44, %s47
      %p53 = scmp.eq.s32.totalorder %s13, 0
      %p54 = por %p52, %p53
      %p55 = scmp.ne.s32.totalorder %s44, %s47
      %p56 = scmp.eq.s32.totalorder %s18, 1
      %p57 = por %p55, %p56
      %p58 = scmp.ne.s32.totalorder %s47, %s48
      %p59 = scmp.eq.s32.totalorder %s18, 0
      %p60 = por %p58, %p59
      %p61 = scmp.ne.s32.totalorder %s47, %s48
      %p62 = scmp.eq.s32.totalorder %s19, 1
      %p63 = por %p61, %p62
      %p65 = scmp.ne.s32.totalorder %s48, %s64
      %p66 = scmp.eq.s32.totalorder %s19, 0
      %p67 = por %p65, %p66
      %s68 = ssub.s32 %s13, %s20
      %p69 = scmp.eq.s32.totalorder %s68, 0
      %s71 = sadd.s32 %s70, 1
      %s72 = scalar_select %p69, %s70, %s71
      %p75 = pneg %p69
      %p76 = scmp.eq.s32.totalorder %s13, 1
      %p77 = por %p75, %p76
      %p78 = scmp.ne.s32.totalorder %s70, %s73
      %p79 = scmp.eq.s32.totalorder %s13, 0
      %p80 = por %p78, %p79
      %p81 = scmp.ne.s32.totalorder %s70, %s73
      %p82 = scmp.eq.s32.totalorder %s18, 1
      %p83 = por %p81, %p82
      %p84 = scmp.ne.s32.totalorder %s73, %s74
      %p85 = scmp.eq.s32.totalorder %s18, 0
      %p86 = por %p84, %p85
      %p87 = scmp.ne.s32.totalorder %s73, %s74
      %p88 = scmp.eq.s32.totalorder %s19, 1
      %p89 = por %p87, %p88
      %p91 = scmp.ne.s32.totalorder %s74, %s90
      %p92 = scmp.eq.s32.totalorder %s19, 0
      %p93 = por %p91, %p92
      %s94 = ssub.s32 %s13, %s20
      %p95 = scmp.eq.s32.totalorder %s94, 0
      %s97 = sadd.s32 %s96, 1
      %s98 = scalar_select %p95, %s96, %s97
      %p101 = pneg %p95
      %p102 = scmp.eq.s32.totalorder %s13, 1
      %p103 = por %p101, %p102
      %p104 = scmp.ne.s32.totalorder %s96, %s99
      %p105 = scmp.eq.s32.totalorder %s13, 0
      %p106 = por %p104, %p105
      %p107 = scmp.ne.s32.totalorder %s96, %s99
      %p108 = scmp.eq.s32.totalorder %s18, 1
      %p109 = por %p107, %p108
      %p110 = scmp.ne.s32.totalorder %s99, %s100
      %p111 = scmp.eq.s32.totalorder %s18, 0
      %p112 = por %p110, %p111
      %p113 = scmp.ne.s32.totalorder %s99, %s100
      %p114 = scmp.eq.s32.totalorder %s19, 1
      %p115 = por %p113, %p114
      %p117 = scmp.ne.s32.totalorder %s100, %s116
      %p118 = scmp.eq.s32.totalorder %s19, 0
      %p119 = por %p117, %p118
      %s120 = ssub.s32 %s13, %s20
      %p121 = scmp.eq.s32.totalorder %s120, 0
      %s123 = sadd.s32 %s122, 1
      %s124 = scalar_select %p121, %s122, %s123
      %p127 = pneg %p121
      %p128 = scmp.eq.s32.totalorder %s13, 1
      %p129 = por %p127, %p128
      %p130 = scmp.ne.s32.totalorder %s122, %s125
      %p131 = scmp.eq.s32.totalorder %s13, 0
      %p132 = por %p130, %p131
      %p133 = scmp.ne.s32.totalorder %s122, %s125
      %p134 = scmp.eq.s32.totalorder %s18, 1
      %p135 = por %p133, %p134
      %p136 = scmp.ne.s32.totalorder %s125, %s126
      %p137 = scmp.eq.s32.totalorder %s18, 0
      %p138 = por %p136, %p137
      %p139 = scmp.ne.s32.totalorder %s125, %s126
      %p140 = scmp.eq.s32.totalorder %s19, 1
      %p141 = por %p139, %p140
      %p143 = scmp.ne.s32.totalorder %s126, %s142
      %p144 = scmp.eq.s32.totalorder %s19, 0
      %p145 = por %p143, %p144
      %p146 = scmp.le.s32.totalorder 1, %s13
      %p147 = scmp.lt.s32.totalorder %s13, 3
      %p148 = pnand %p146, %p147
      %p149 = pneg %p148
      // Predicated region
      $region9: #{tpu_custom_call.1} parent=5 // pred_check
        _
      $region10: #{tpu_custom_call.1} parent=5 // pred_check_branch
        %151 = sbr.rel (%p148) target = $region12
      $region11: #{tpu_custom_call.1} parent=5 // pred_region
        %s152 = ssub.s32 %s13, 1
        // Predicated region
        $region13: #{tpu_custom_call.1} parent=11 // pred_check
          %p153 = pneg %p34
        $region14: #{tpu_custom_call.1} parent=11 // pred_check_branch
          %155 = sbr.rel (%p153) target = $region16
        $region15: #{tpu_custom_call.1} parent=11 // pred_region
          _
        $region16: #{tpu_custom_call.1} parent=11 // pred_fallthru
          _
      $region12: #{tpu_custom_call.1} parent=5 // pred_fallthru
        _
      %p156 = scmp.lt.s32.totalorder %s13, 2
      // Predicated region
      $region17: #{tpu_custom_call.1} parent=5 // pred_check
        %p157 = pneg %p156
      $region18: #{tpu_custom_call.1} parent=5 // pred_check_branch
        %159 = sbr.rel (%p157) target = $region20
      $region19: #{tpu_custom_call.1} parent=5 // pred_region
        // Predicated region
        $region21: #{tpu_custom_call.1} parent=19 // pred_check
          %p160 = pneg %p54
        $region22: #{tpu_custom_call.1} parent=19 // pred_check_branch
          %162 = sbr.rel (%p160) target = $region24
        $region23: #{tpu_custom_call.1} parent=19 // pred_region
          %p163 = scmp.lt.s32.totalorder %s13, 1
          %s164 = scalar_select %p163, %s13, 1
          %s165 = smul.addr %s164, 8
          %s166 = scalar_lea.vmem %s1, %s165
        $region24: #{tpu_custom_call.1} parent=19 // pred_fallthru
          _
        // Predicated region
        $region25: #{tpu_custom_call.1} parent=19 // pred_check
          %p167 = pneg %p80
        $region26: #{tpu_custom_call.1} parent=19 // pred_check_branch
          %169 = sbr.rel (%p167) target = $region28
        $region27: #{tpu_custom_call.1} parent=19 // pred_region
          %p170 = scmp.lt.s32.totalorder %s13, 1
          %s171 = scalar_select %p170, %s13, 1
          %s172 = smul.addr %s171, 8
          %s173 = scalar_lea.vmem %s2, %s172
        $region28: #{tpu_custom_call.1} parent=19 // pred_fallthru
          _
        // Predicated region
        $region29: #{tpu_custom_call.1} parent=19 // pred_check
          %p174 = pneg %p106
        $region30: #{tpu_custom_call.1} parent=19 // pred_check_branch
          %176 = sbr.rel (%p174) target = $region32
        $region31: #{tpu_custom_call.1} parent=19 // pred_region
          %p177 = scmp.lt.s32.totalorder %s13, 1
          %s178 = scalar_select %p177, %s13, 1
          %s179 = smul.addr %s178, 8
          %s180 = scalar_lea.vmem %s3, %s179
        $region32: #{tpu_custom_call.1} parent=19 // pred_fallthru
          _
      $region20: #{tpu_custom_call.1} parent=5 // pred_fallthru
        _
      %p181 = scmp.le.s32.totalorder 1, %s13
      %p182 = scmp.lt.s32.totalorder %s13, 3
      %p183 = pnand %p181, %p182
      %p184 = pneg %p183
      // Predicated region
      $region33: #{tpu_custom_call.1} parent=5 // pred_check
        _
      $region34: #{tpu_custom_call.1} parent=5 // pred_check_branch
        %186 = sbr.rel (%p183) target = $region36
      $region35: #{tpu_custom_call.1} parent=5 // pred_region
        %s187 = ssub.s32 %s13, 1
        %p188 = pneg %p34
        %p189 = pneg %p31
        %p190 = scmp.lt.s32.totalorder %s18, 1
        %s191 = scalar_select %p190, %s18, 1
        %s192 = smul.addr %s191, 8
        %s193 = scalar_lea.vmem %s1, %s192
        %p194 = pneg %p60
        %p195 = pneg %p57
        %p196 = scmp.lt.s32.totalorder %s18, 1
        %s197 = scalar_select %p196, %s18, 1
        %s198 = smul.addr %s197, 8
        %s199 = scalar_lea.vmem %s2, %s198
        %p200 = pneg %p86
        %p201 = pneg %p83
        %p202 = scmp.lt.s32.totalorder %s18, 1
        %s203 = scalar_select %p202, %s18, 1
        %s204 = smul.addr %s203, 8
        %s205 = scalar_lea.vmem %s3, %s204
        %p206 = pneg %p112
        %p207 = pneg %p109
        %p208 = pneg %p138
        %p209 = pneg %p135
        %s210 = sand.u32 %s125, 1
        %s211 = scalar_lea.sflag [#allocation3], %s210
        %s212 = sand.u32 %s125, 1
        %s213 = smul.addr %s212, 8
        %s214 = scalar_lea.vmem [#allocation2], %s213
        %p215 = scmp.lt.s32.totalorder %s18, 1
        %s216 = scalar_select %p215, %s18, 1
        %s217 = smul.addr %s216, 8
        %s218 = scalar_lea.vmem %s1, %s217
        %p219 = scmp.lt.s32.totalorder %s18, 1
        %s220 = scalar_select %p219, %s18, 1
        %s221 = smul.addr %s220, 8
        %s222 = scalar_lea.vmem %s2, %s221
        %p223 = scmp.lt.s32.totalorder %s18, 1
        %s224 = scalar_select %p223, %s18, 1
        %s225 = smul.addr %s224, 8
        %s226 = scalar_lea.vmem %s3, %s225
        %v227 = vld [vmem:[%s222] sm:$0xff]
        %v228 = vld [vmem:[%s226] sm:$0xff]
        %v229 = vld [vmem:[%s0] sm:$0x1]
        %v230 = vld [vmem:[%s218] sm:$0xff]
        %v231 = vlaneseq
        %v232 = vshrl.u32 %v231, 7
        %v233 = vsub.s32 0, %v232
        %v234 = vrot.slane %v229, %v233
        %235 = vset.pattern.permute.xlu0 0
        %236 = vperm.xlu0 %235, %v227
        %v237 = vpop.permute.xlu0 %236
        %vm238 = vcmp.eq.s32.totalorder %v234, %v237
        %v239 = vsel %vm238, %v230, 0.0
        %vm240 = vcmask 261120
        %v241 = vsel %vm240, %v239, 0.0
        %242 = vadd.xlane.f32.xlu0 %v241
        %v243 = vpop.xlane.xlu0 %242
        %v244 = vlaneseq
        %v245 = vshrl.u32 %v244, 7
        %s246 = smul.u32 %s18, 8
        %v247 = vstv %s246
        %v248 = vadd.s32 %v245, %v247
        %vm249 = vcmp.lt.s32.totalorder %v248, 16
        %v250 = vmul.f32 %v243, %v228
        %v251 = vsel %vm249, %v250, 0.0
        %vm252 = vcmask 7168
        %v253 = vsel %vm252, %v251, 0.0
        %v254 = vrot.slane %v253, 4
        %v255 = vadd.f32 %v253, %v254
        %v256 = vrot.slane %v255, 2
        %v257 = vadd.f32 %v255, %v256
        %v258 = vrot.slane %v257, 1
        %v259 = vadd.f32 %v257, %v258
        %261 = vset.pattern.permute.xlu0 0
        %262 = vperm.xlu0 %261, %v259
        %v263 = vpop.permute.xlu0 %262
        %265 = vst [vmem:[%s214] sm:$0xff] %v263
        %s266 = sand.u32 %s125, 1
        %s267 = scalar_lea.sflag [#allocation3], %s266
        %s268 = sand.u32 %s125, 1
        %s269 = smul.addr %s268, 8
        %s270 = scalar_lea.vmem [#allocation2], %s269
        // Predicated region
        $region37: #{tpu_custom_call.1} parent=35 // pred_check
          %p271 = pneg %p135
        $region38: #{tpu_custom_call.1} parent=35 // pred_check_branch
          %273 = sbr.rel (%p271) target = $region40
        $region39: #{tpu_custom_call.1} parent=35 // pred_region
          %s275 = ssub.s32 128, 128
          %276 = vsyncadd %s267, %s275
          %s277 = smul.addr %s18, 128
          %s278 = scalar_lea.hbm %s4, %s277
          %s280 = sshll.u32 %s270, 4
          %s281 = int_to_ptr.vmem [resolvable:$true] %s280
          %283 = dma.vmem_to_hbm [thread:$0]  %s281, 128, %s278, %s267
        $region40: #{tpu_custom_call.1} parent=35 // pred_fallthru
          _
      $region36: #{tpu_custom_call.1} parent=5 // pred_fallthru
        _
      %p284 = scmp.le.s32.totalorder 2, %s13
      // Predicated region
      $region41: #{tpu_custom_call.1} parent=5 // pred_check
        %p285 = pneg %p284
      $region42: #{tpu_custom_call.1} parent=5 // pred_check_branch
        %287 = sbr.rel (%p285) target = $region44
      $region43: #{tpu_custom_call.1} parent=5 // pred_region
        %s288 = ssub.s32 %s13, 2
        // Predicated region
        $region45: #{tpu_custom_call.1} parent=43 // pred_check
          %p289 = pneg %p141
        $region46: #{tpu_custom_call.1} parent=43 // pred_check_branch
          %291 = sbr.rel (%p289) target = $region48
        $region47: #{tpu_custom_call.1} parent=43 // pred_region
          %s292 = sand.u32 %s126, 1
          %s293 = scalar_lea.sflag [#allocation3], %s292
          %s294 = sand.u32 %s126, 1
          %s295 = smul.addr %s294, 8
          %s296 = scalar_lea.vmem [#allocation2], %s295
          %297 = dma.done %s293, 128
        $region48: #{tpu_custom_call.1} parent=43 // pred_fallthru
          _
      $region44: #{tpu_custom_call.1} parent=5 // pred_fallthru
        _
    $region6: #{tpu_custom_call.1} parent=1 // loop_footer
      %s17 = sadd.s32 1, %s13
    $region7: #{tpu_custom_call.1} parent=1 // loop_footer_branch
      %12 = sbr.rel target = $region3
    $region8: #{tpu_custom_call.1} parent=1 // loop_exit
      _
    %298 = vsyncpa [#allocation3], 1
    %s299 = scalar_lea.sflag [#allocation3], 1
    %300 = vsyncpa %s299, 1

</llo_original>
